<compile_context>
chip_gen: v5e
topology: v5e:2x2
jax: 0.10.0
libtpu: 0.0.40
codegen_flags: <defaults>
</compile_context>

<pallas_src>
import functools

import jax
import jax.numpy as jnp
from jax import lax
from jax.experimental import pallas as pl
from jax.experimental.pallas import tpu as pltpu


def _round_up(a: int, b: int) -> int:
    return (a + b - 1) // b * b


def _vmem_capacity_bytes() -> int:
    """Physical per-core VMEM; conservative fallback if the query fails."""
    try:
        info = pltpu.get_tpu_info()
        cap = int(getattr(info, "vmem_capacity_bytes", 0))
        if cap > 0:
            return cap
    except Exception:
        pass
    return 64 << 20  # v7x per-TC size: safe lower bound


def _pick_tm(n_rows: int, tm_max: int) -> int:
    """Row-tile choice: minimize padding, prefer >=2 grid steps (v7x megacore)."""
    cands = [c for c in (512, 384, 256, 192, 128) if c <= tm_max]
    if n_rows < 256 or not cands:
        # small inputs: allow smaller tiles so the parallel row axis still has
        # >=2 steps without padding a handful of rows up to 128+
        cands += [96, 64, 48, 32, 16, 8]
    best = None
    for c in cands:
        tiles = -(-n_rows // c)
        pad = tiles * c - n_rows
        score = (0 if tiles >= 2 else 1, pad, -c)
        if best is None or score < best[1]:
            best = (c, score)
    return best[0]


def _ffn_kernel(x_ref, w1_ref, b1_ref, w2_ref, pk_ref, o_ref, acc_ref,
                *, d_real, d_pad):
    # x_ref:  (tm, d_pad)   f32 row tile (pad cols are zero), revisited over k
    # w1_ref: (d_pad, tk)   bf16 column slice of W1
    # b1_ref: (1, tk)       f32 slice of b1
    # w2_ref: (tk, d_pad)   bf16 row slice of W2
    # pk_ref: (3, d_pad)    f32 rows = [b2, gamma, beta]
    # o_ref:  (tm, d_pad)   output tile
    # acc_ref:(tm, d_pad)   f32 accumulator scratch
    k = pl.program_id(1)

    @pl.when(k == 0)
    def _():
        acc_ref[...] = jnp.zeros_like(acc_ref)

    x = x_ref[...]

    # l_1 slice + ReLU -- bf16 MXU matmul, f32 accumulate
    h = jnp.dot(x.astype(jnp.bfloat16), w1_ref[...],
                preferred_element_type=jnp.float32)
    h = jnp.maximum(h + b1_ref[...], 0.0)

    # l_2 slice, accumulated over the hidden-dim grid axis
    acc_ref[...] += jnp.dot(h.astype(jnp.bfloat16), w2_ref[...],
                            preferred_element_type=jnp.float32)

    @pl.when(k == pl.num_programs(1) - 1)
    def _():
        p = pk_ref[...]
        b2 = p[0:1, :]
        gamma = p[1:2, :]
        beta = p[2:3, :]

        # dropout (eval mode -> identity), bias + residual add in f32
        y = acc_ref[...] + b2 + x

        # LayerNorm over the real (unpadded) feature width, eps=1e-6, biased var.
        # Pad columns of y are exactly zero (zero-padded x / W2 cols / b2), so
        # cen there equals -mean; correct the sum-of-squares analytically
        # instead of materializing an iota mask every grid step.
        inv_d = jnp.float32(1.0 / d_real)
        mean = jnp.sum(y, axis=-1, keepdims=True) * inv_d
        cen = y - mean
        ss = jnp.sum(cen * cen, axis=-1, keepdims=True)
        if d_pad != d_real:
            ss = ss - jnp.float32(d_pad - d_real) * (mean * mean)
        var = ss * inv_d
        # gamma/beta pad cols are zero, so pad output cols land at exactly 0.
        o = cen * lax.rsqrt(var + jnp.float32(1e-6)) * gamma + beta
        o_ref[...] = o.astype(o_ref.dtype)


def prepare_ffn_params(w1, b1, w2, b2, gamma, beta):
    """One-time weight prep: lane-dense padding + bf16 cast + packing.

    Hoisted out of the per-call wrapper so inference calls do no weight
    padding / casting / extra HBM passes.
    """
    d_in, d_hidden = w1.shape
    d_pad = _round_up(d_in, 128)
    dh_pad = _round_up(d_hidden, 128)

    w1p = jnp.pad(w1, ((0, d_pad - d_in), (0, dh_pad - d_hidden))).astype(jnp.bfloat16)
    w2p = jnp.pad(w2, ((0, dh_pad - d_hidden), (0, d_pad - d_in))).astype(jnp.bfloat16)
    b1p = jnp.pad(b1.astype(jnp.float32), (0, dh_pad - d_hidden)).reshape(1, dh_pad)
    pk = jnp.stack([
        jnp.pad(b2.astype(jnp.float32), (0, d_pad - d_in)),
        jnp.pad(gamma.astype(jnp.float32), (0, d_pad - d_in)),
        jnp.pad(beta.astype(jnp.float32), (0, d_pad - d_in)),
    ], axis=0)
    return {"w1": w1p, "b1": b1p, "w2": w2p, "pk": pk,
            "d_in": d_in, "d_hidden": d_hidden, "d_pad": d_pad, "dh_pad": dh_pad}


def positionwise_ffn_prepped(x, params, *, tk_hidden=512):
    """x: [B, S, d_in]. params: output of prepare_ffn_params. Returns [B, S, d_in]."""
    B, S, d_in = x.shape
    assert d_in == params["d_in"], "feature dim mismatch with prepared params"
    d_pad, dh_pad = params["d_pad"], params["dh_pad"]
    N = B * S

    # --- generation-aware tiling / VMEM budget ---------------------------------
    vmem_cap = _vmem_capacity_bytes()
    tm_max = 512 if vmem_cap >= (100 << 20) else 256   # bigger row tile on v5e/v6e
    tm = _pick_tm(N, tm_max)
    n_pad = _round_up(N, tm)
    n_tiles = n_pad // tm

    # hidden-dim reduction tile: multiple of 128 dividing dh_pad, <= tk_hidden
    tk = min(_round_up(tk_hidden, 128), dh_pad)
    while dh_pad % tk != 0:
        tk -= 128
    nk = dh_pad // tk

    # --- input prep (skip copies when already aligned) --------------------------
    x2 = x.reshape(N, d_in)
    if x2.dtype != jnp.float32:
        x2 = x2.astype(jnp.float32)
    if n_pad != N or d_pad != d_in:
        x2 = jnp.pad(x2, ((0, n_pad - N), (0, d_pad - d_in)))

    # --- scoped VMEM budget from the reduced footprint --------------------------
    est = (2 * tm * d_pad * 4          # x tile, double buffered
           + 2 * tm * d_pad * 4        # out tile, double buffered
           + tm * d_pad * 4            # accumulator scratch
           + 2 * d_pad * tk * 2        # W1 k-slice (bf16), double buffered
           + 2 * tk * d_pad * 2        # W2 k-slice (bf16), double buffered
           + 2 * 8 * tk * 4            # b1 slice (sublane padded)
           + 2 * 8 * d_pad * 4         # packed b2/gamma/beta
           + 2 * tm * tk * 4)          # hidden intermediate headroom
    cap = min(int(vmem_cap * 0.85), 100 << 20)   # never request all of v7x's 64 MiB
    vmem_limit = int(min(max(int(est * 1.5) + (8 << 20), 32 << 20), cap))

    cost = pl.CostEstimate(
        flops=4 * n_pad * d_pad * dh_pad,            # two matmuls
        transcendentals=n_pad,                       # one rsqrt per row
        bytes_accessed=(2 * n_pad * d_pad * 4        # x in + out
                        + 2 * d_pad * dh_pad * 2     # bf16 weights
                        + (dh_pad + 3 * d_pad) * 4),
    )

    kernel = functools.partial(_ffn_kernel, d_real=d_in, d_pad=d_pad)

    out = pl.pallas_call(
        kernel,
        out_shape=jax.ShapeDtypeStruct((n_pad, d_pad), x.dtype),
        grid_spec=pltpu.PrefetchScalarGridSpec(
            num_scalar_prefetch=0,
            grid=(n_tiles, nk),
            in_specs=[
                pl.BlockSpec((tm, d_pad), lambda i, k: (i, 0)),   # x (revisited over k)
                pl.BlockSpec((d_pad, tk), lambda i, k: (0, k)),   # W1 column slice
                pl.BlockSpec((1, tk), lambda i, k: (0, k)),       # b1 slice
                pl.BlockSpec((tk, d_pad), lambda i, k: (k, 0)),   # W2 row slice
                pl.BlockSpec((3, d_pad), lambda i, k: (0, 0)),    # [b2, gamma, beta]
            ],
            out_specs=pl.BlockSpec((tm, d_pad), lambda i, k: (i, 0)),
            scratch_shapes=[pltpu.VMEM((tm, d_pad), jnp.float32)],
        ),
        compiler_params=pltpu.CompilerParams(
            dimension_semantics=("parallel", "arbitrary"),
            vmem_limit_bytes=vmem_limit,
        ),
        cost_estimate=cost,
    )(x2, params["w1"], params["b1"], params["w2"], params["pk"])

    if n_pad != N or d_pad != d_in:
        out = out[:N, :d_in]
    return out.reshape(B, S, d_in)


def positionwise_ffn(x, w1, b1, w2, b2, gamma, beta):
    """Convenience wrapper: prepares params each call (use prepare_ffn_params +
    positionwise_ffn_prepped for repeated inference)."""
    params = prepare_ffn_params(w1, b1, w2, b2, gamma, beta)
    return positionwise_ffn_prepped(x, params)


def _reference(x, w1, b1, w2, b2, gamma, beta):
    h = jnp.maximum(x @ w1 + b1, 0.0)
    y = h @ w2 + b2 + x
    mean = jnp.mean(y, axis=-1, keepdims=True)
    var = jnp.mean((y - mean) ** 2, axis=-1, keepdims=True)
    return (y - mean) / jnp.sqrt(var + 1e-6) * gamma + beta


if __name__ == "__main__":
    key = jax.random.PRNGKey(0)
    B, S, d_in, d_hidden = 2, 8, 32, 64

    k = jax.random.split(key, 6)
    # deterministic synthetic params (nn.Linear-like uniform init)
    lim1 = 1.0 / (d_in ** 0.5)
    lim2 = 1.0 / (d_hidden ** 0.5)
    x = jax.random.normal(k[0], (B, S, d_in), jnp.float32)
    w1 = jax.random.uniform(k[1], (d_in, d_hidden), jnp.float32, -lim1, lim1)
    b1 = jax.random.uniform(k[2], (d_hidden,), jnp.float32, -lim1, lim1)
    w2 = jax.random.uniform(k[3], (d_hidden, d_in), jnp.float32, -lim2, lim2)
    b2 = jax.random.uniform(k[4], (d_in,), jnp.float32, -lim2, lim2)
    gamma = jnp.ones((d_in,), jnp.float32)
    beta = jnp.zeros((d_in,), jnp.float32)

    params = prepare_ffn_params(w1, b1, w2, b2, gamma, beta)
    out = positionwise_ffn_prepped(x, params)
    out = jax.block_until_ready(out)

    ref = _reference(x, w1, b1, w2, b2, gamma, beta)
    assert out.shape == (B, S, d_in)
    # matmuls run in bf16 on the MXU (f32 accumulate), so use a bf16-level tolerance
    assert jnp.allclose(out, ref, atol=2e-2, rtol=2e-2), "mismatch vs reference"
    print("KERNEL_OK")
</pallas_src>

<mosaic_0001>
module attributes {stable_mosaic.version = 11 : i64} {
  func.func @_ffn_kernel(%arg0: i32, %arg1: i32, %arg2: memref<8x128xf32, #tpu.memory_space<vmem>>, %arg3: memref<128x128xbf16, #tpu.memory_space<vmem>>, %arg4: memref<1x128xf32, #tpu.memory_space<vmem>>, %arg5: memref<128x128xbf16, #tpu.memory_space<vmem>>, %arg6: memref<3x128xf32, #tpu.memory_space<vmem>>, %arg7: memref<8x128xf32, #tpu.memory_space<vmem>>, %arg8: memref<8x128xf32, #tpu.memory_space<vmem>>) attributes {dimension_semantics = [#tpu.dimension_semantics<parallel>, #tpu.dimension_semantics<arbitrary>], iteration_bounds = array<i64: 2, 1>, scalar_prefetch = 0 : i64, scratch_operands = 1 : i64, tpu.core_type = #tpu.core_type<tc>, window_params = [{transform_indices = @transform_0, window_bounds = array<i64: 8, 128>}, {transform_indices = @transform_1, window_bounds = array<i64: 128, 128>}, {transform_indices = @transform_2, window_bounds = array<i64: 1, 128>}, {transform_indices = @transform_3, window_bounds = array<i64: 128, 128>}, {pipeline_mode = #tpu.pipeline_mode<synchronous>, transform_indices = @transform_4, window_bounds = array<i64: 3, 128>}, {transform_indices = @transform_5, window_bounds = array<i64: 8, 128>}]} {
    %c0_i32 = arith.constant 0 : i32
    %0 = arith.cmpi eq, %arg1, %c0_i32 : i32
    %1 = arith.extui %0 : i1 to i32
    %c0_i32_0 = arith.constant 0 : i32
    %2 = arith.cmpi ne, %1, %c0_i32_0 : i32
    scf.if %2 {
      %cst_16 = arith.constant 0.000000e+00 : f32
      %21 = vector.broadcast %cst_16 : f32 to vector<8x128xf32>
      %c0_17 = arith.constant 0 : index
      %c0_18 = arith.constant 0 : index
      %22 = vector.load %arg8[%c0_17, %c0_18] : memref<8x128xf32, #tpu.memory_space<vmem>>, vector<8x128xf32>
      tpu.vector_store %arg8[%c0_17, %c0_18], %21 {strides = array<i32>} : memref<8x128xf32, #tpu.memory_space<vmem>>, vector<8x128xf32>,
    } else {
    }
    %c0 = arith.constant 0 : index
    %c0_1 = arith.constant 0 : index
    %3 = vector.load %arg2[%c0, %c0_1] : memref<8x128xf32, #tpu.memory_space<vmem>>, vector<8x128xf32>
    %4 = arith.truncf %3 : vector<8x128xf32> to vector<8x128xbf16>
    %c0_2 = arith.constant 0 : index
    %c0_3 = arith.constant 0 : index
    %5 = vector.load %arg3[%c0_2, %c0_3] : memref<128x128xbf16, #tpu.memory_space<vmem>>, vector<128x128xbf16>
    %cst = arith.constant dense<0.000000e+00> : vector<8x128xf32>
    %6 = tpu.matmul %4, %5, %cst {dimension_numbers = #tpu.dot_dimension_numbers<[1], [0], [0], [1], [0, 0, 1, 1], [], []>} : vector<8x128xbf16>, vector<128x128xbf16>, vector<8x128xf32> -> vector<8x128xf32>
    %c0_4 = arith.constant 0 : index
    %c0_5 = arith.constant 0 : index
    %7 = vector.load %arg4[%c0_4, %c0_5] : memref<1x128xf32, #tpu.memory_space<vmem>>, vector<1x128xf32>
    %8 = vector.broadcast %7 : vector<1x128xf32> to vector<8x128xf32>
    %9 = arith.addf %6, %8 : vector<8x128xf32>
    %cst_6 = arith.constant 0.000000e+00 : f32
    %10 = vector.broadcast %cst_6 : f32 to vector<8x128xf32>
    %11 = arith.maximumf %9, %10 : vector<8x128xf32>
    %c0_7 = arith.constant 0 : index
    %c0_8 = arith.constant 0 : index
    %12 = vector.load %arg8[%c0_7, %c0_8] : memref<8x128xf32, #tpu.memory_space<vmem>>, vector<8x128xf32>
    %13 = arith.truncf %11 : vector<8x128xf32> to vector<8x128xbf16>
    %c0_9 = arith.constant 0 : index
    %c0_10 = arith.constant 0 : index
    %14 = vector.load %arg5[%c0_9, %c0_10] : memref<128x128xbf16, #tpu.memory_space<vmem>>, vector<128x128xbf16>
    %cst_11 = arith.constant dense<0.000000e+00> : vector<8x128xf32>
    %15 = tpu.matmul %13, %14, %cst_11 {dimension_numbers = #tpu.dot_dimension_numbers<[1], [0], [0], [1], [0, 0, 1, 1], [], []>} : vector<8x128xbf16>, vector<128x128xbf16>, vector<8x128xf32> -> vector<8x128xf32>
    %16 = arith.addf %12, %15 : vector<8x128xf32>
    %c0_12 = arith.constant 0 : index
    %c0_13 = arith.constant 0 : index
    %17 = vector.load %arg8[%c0_12, %c0_13] : memref<8x128xf32, #tpu.memory_space<vmem>>, vector<8x128xf32>
    tpu.vector_store %arg8[%c0_12, %c0_13], %16 {strides = array<i32>} : memref<8x128xf32, #tpu.memory_space<vmem>>, vector<8x128xf32>,
    %c0_i32_14 = arith.constant 0 : i32
    %18 = arith.cmpi eq, %arg1, %c0_i32_14 : i32
    %19 = arith.extui %18 : i1 to i32
    %c0_i32_15 = arith.constant 0 : i32
    %20 = arith.cmpi ne, %19, %c0_i32_15 : i32
    scf.if %20 {
      %c0_16 = arith.constant 0 : index
      %c0_17 = arith.constant 0 : index
      %21 = vector.load %arg6[%c0_16, %c0_17] : memref<3x128xf32, #tpu.memory_space<vmem>>, vector<3x128xf32>
      %22 = vector.extract_strided_slice %21 {offsets = [0, 0], sizes = [1, 128], strides = [1, 1]} : vector<3x128xf32> to vector<1x128xf32>
      %23 = vector.extract_strided_slice %21 {offsets = [1, 0], sizes = [1, 128], strides = [1, 1]} : vector<3x128xf32> to vector<1x128xf32>
      %24 = vector.extract_strided_slice %21 {offsets = [2, 0], sizes = [1, 128], strides = [1, 1]} : vector<3x128xf32> to vector<1x128xf32>
      %c0_18 = arith.constant 0 : index
      %c0_19 = arith.constant 0 : index
      %25 = vector.load %arg8[%c0_18, %c0_19] : memref<8x128xf32, #tpu.memory_space<vmem>>, vector<8x128xf32>
      %26 = vector.broadcast %22 : vector<1x128xf32> to vector<8x128xf32>
      %27 = arith.addf %25, %26 : vector<8x128xf32>
      %28 = arith.addf %27, %3 : vector<8x128xf32>
      %cst_20 = arith.constant dense<0.000000e+00> : vector<8xf32>
      %29 = vector.multi_reduction <add>, %28, %cst_20 [1] : vector<8x128xf32> to vector<8xf32>
      %30 = vector.shape_cast %29 : vector<8xf32> to vector<8x1xf32>
      %cst_21 = arith.constant 3.125000e-02 : f32
      %31 = vector.broadcast %cst_21 : f32 to vector<8x1xf32>
      %32 = arith.mulf %30, %31 : vector<8x1xf32>
      %33 = vector.broadcast %32 : vector<8x1xf32> to vector<8x128xf32>
      %34 = arith.subf %28, %33 : vector<8x128xf32>
      %35 = arith.mulf %34, %34 : vector<8x128xf32>
      %cst_22 = arith.constant dense<0.000000e+00> : vector<8xf32>
      %36 = vector.multi_reduction <add>, %35, %cst_22 [1] : vector<8x128xf32> to vector<8xf32>
      %37 = vector.shape_cast %36 : vector<8xf32> to vector<8x1xf32>
      %38 = arith.mulf %32, %32 : vector<8x1xf32>
      %cst_23 = arith.constant 9.600000e+01 : f32
      %39 = vector.broadcast %cst_23 : f32 to vector<8x1xf32>
      %40 = arith.mulf %39, %38 : vector<8x1xf32>
      %41 = arith.subf %37, %40 : vector<8x1xf32>
      %cst_24 = arith.constant 3.125000e-02 : f32
      %42 = vector.broadcast %cst_24 : f32 to vector<8x1xf32>
      %43 = arith.mulf %41, %42 : vector<8x1xf32>
      %cst_25 = arith.constant 9.99999997E-7 : f32
      %44 = vector.broadcast %cst_25 : f32 to vector<8x1xf32>
      %45 = arith.addf %43, %44 : vector<8x1xf32>
      %46 = math.rsqrt %45 : vector<8x1xf32>
      %47 = vector.broadcast %46 : vector<8x1xf32> to vector<8x128xf32>
      %48 = arith.mulf %34, %47 : vector<8x128xf32>
      %49 = vector.broadcast %23 : vector<1x128xf32> to vector<8x128xf32>
      %50 = arith.mulf %48, %49 : vector<8x128xf32>
      %51 = vector.broadcast %24 : vector<1x128xf32> to vector<8x128xf32>
      %52 = arith.addf %50, %51 : vector<8x128xf32>
      %c0_26 = arith.constant 0 : index
      %c0_27 = arith.constant 0 : index
      %53 = vector.load %arg7[%c0_26, %c0_27] : memref<8x128xf32, #tpu.memory_space<vmem>>, vector<8x128xf32>
      tpu.vector_store %arg7[%c0_26, %c0_27], %52 {strides = array<i32>} : memref<8x128xf32, #tpu.memory_space<vmem>>, vector<8x128xf32>,
    } else {
    }
    return
  }
  func.func @transform_0(%arg0: i32, %arg1: i32) -> (i32, i32) {
    %c0_i32 = arith.constant 0 : i32
    %c0_i32_0 = arith.constant 0 : i32
    return %arg0, %c0_i32 : i32, i32
  }
  func.func @transform_1(%arg0: i32, %arg1: i32) -> (i32, i32) {
    %c0_i32 = arith.constant 0 : i32
    %c0_i32_0 = arith.constant 0 : i32
    return %c0_i32, %arg1 : i32, i32
  }
  func.func @transform_2(%arg0: i32, %arg1: i32) -> (i32, i32) {
    %c0_i32 = arith.constant 0 : i32
    %c0_i32_0 = arith.constant 0 : i32
    return %c0_i32, %arg1 : i32, i32
  }
  func.func @transform_3(%arg0: i32, %arg1: i32) -> (i32, i32) {
    %c0_i32 = arith.constant 0 : i32
    %c0_i32_0 = arith.constant 0 : i32
    return %arg1, %c0_i32 : i32, i32
  }
  func.func @transform_4(%arg0: i32, %arg1: i32) -> (i32, i32) {
    %c0_i32 = arith.constant 0 : i32
    %c0_i32_0 = arith.constant 0 : i32
    %c0_i32_1 = arith.constant 0 : i32
    return %c0_i32, %c0_i32_0 : i32, i32
  }
  func.func @transform_5(%arg0: i32, %arg1: i32) -> (i32, i32) {
    %c0_i32 = arith.constant 0 : i32
    %c0_i32_0 = arith.constant 0 : i32
    return %arg0, %c0_i32 : i32, i32
  }
}

</mosaic_0001>

<llo_original>
// kernel: tpu_custom_call.1
$region0: #{tpu_custom_call.1}
  #allocation0 [shape = 'u32[]', space=smem, size = 0x4, offset = 0x4, fixed_abs, tag = 'smem constant byte address 0x4 - core index']
  #allocation1 [shape = 'u32[72,128]{1,0:T(1,128)}', space=vmem, size = 0x9000, scoped, tag = 'internal scratch']
  #allocation2 [shape = 'f32[8,128]{1,0:T(8,128)}', space=vmem, size = 0x1000, scoped, tag = 'scratch operand']
  %s0 = inlined_call_operand.hbm [shape: f32[16,128], index: 0, kind: input, shape index: {}]
  %s1 = inlined_call_operand.hbm [shape: bf16[128,128], index: 1, kind: input, shape index: {}]
  %s2 = inlined_call_operand.vmem [shape: f32[1,128], index: 2, kind: input, shape index: {}]
  %s3 = inlined_call_operand.hbm [shape: bf16[128,128], index: 3, kind: input, shape index: {}]
  %s4 = inlined_call_operand.hbm [shape: f32[3,128], index: 4, kind: input, shape index: {}]
  %s5 = inlined_call_operand.hbm [shape: f32[16,128], index: 5, kind: output, shape index: {}]
  %s6 = sld [smem:[#allocation0]]
  $region77: #{tpu_custom_call.1} parent=0
    _
  %s8 = ssub.s32 1, %s6
  %s9 = scalar_select 0, %s8, %s6
  $region1: #{tpu_custom_call.1} parent=0
    #allocation3 [shape = 'u8[8192]{0}', space=vmem, size = 0x2000, scoped, tag = 'input window, operand 0']
    #allocation4 [shape = 's32[2]{0}', space=sflag, size = 0x8, scoped, tag = 'scoped memory for tpu_custom_call.1']
    #allocation5 [shape = 's32[2]{0}', space=sflag, size = 0x8, scoped, tag = 'scoped memory for tpu_custom_call.1']
    #allocation6 [shape = 'u8[32768]{0}', space=vmem, size = 0x8000, scoped, tag = 'input window, operand 1, single buffered']
    #allocation7 [shape = 's32[1]{0}', space=sflag, size = 0x4, scoped, tag = 'scoped memory for tpu_custom_call.1']
    #allocation8 [shape = 'u8[32768]{0}', space=vmem, size = 0x8000, scoped, tag = 'input window, operand 3, single buffered']
    #allocation9 [shape = 'u8[2048]{0}', space=vmem, size = 0x800, scoped, tag = 'input window, operand 4, single buffered']
    #allocation10 [shape = 's32[1]{0}', space=sflag, size = 0x4, scoped, tag = 'scoped memory for tpu_custom_call.1']
    #allocation11 [shape = 'u8[8192]{0}', space=vmem, size = 0x2000, scoped, tag = 'output window, operand 0']
    %10 = vsyncpa [#allocation4], 0
    %s11 = scalar_lea.sflag [#allocation4], 1
    %12 = vsyncpa %s11, 0
    %13 = vsyncpa [#allocation7], 0
    %14 = vsyncpa [#allocation10], 0
    %15 = vsyncpa [#allocation5], 0
    %s16 = scalar_lea.sflag [#allocation5], 1
    %17 = vsyncpa %s16, 0
    loop: start=0, step=1, limit=4
    $region2: #{tpu_custom_call.1} parent=1 // loop_pre_header
      _
    $region3: #{tpu_custom_call.1} parent=1 // loop_header
      %s19 = sphi 0, %s23
      %p20 = scmp.ge.s32.totalorder %s19, 4
      %s26 = sphi 0, %s38
      %s27 = sphi 0, %s34
      %s28 = sphi 0, %s26
      %s29 = sphi 0, %s27
      %s30 = sphi 0, %s28
      %s31 = sphi 0, %s29
      %s41 = sphi 0, %s43
      %s44 = sphi 0, %s41
      %s45 = sphi 0, %s44
      %s61 = sphi 0, %s45
      %s67 = sphi 0, %s69
      %s70 = sphi 0, %s67
      %s71 = sphi 0, %s70
      %s87 = sphi 0, %s71
      %s93 = sphi 0, %s95
      %s96 = sphi 0, %s93
      %s97 = sphi 0, %s96
      %s113 = sphi 0, %s97
      %s119 = sphi 0, %s121
      %s122 = sphi 0, %s119
      %s123 = sphi 0, %s122
      %s139 = sphi 0, %s123
      %s143 = sphi 0, %s143
      %s145 = sphi 0, %s143
      %s146 = sphi 0, %s145
      %s160 = sphi 0, %s146
      %s166 = sphi 0, %s168
      %s169 = sphi 0, %s166
      %s170 = sphi 0, %s169
      %s186 = sphi 0, %s170
    $region4: #{tpu_custom_call.1} parent=1 // loop_header_branch
      %22 = sbr.rel (%p20) target = $region8
    $region5: #{tpu_custom_call.1} parent=1 // loop_body
      %s24 = ssub.s32 %s19, 1
      %s25 = ssub.s32 %s19, 2
      %s32 = sadd.s32 1, %s27
      %p33 = scmp.ge.s32.totalorder %s32, 1
      %s34 = scalar_select %p33, 0, %s32
      %s35 = sadd.s32 1, %s26
      %s36 = scalar_select %p33, %s35, %s26
      %p37 = scmp.ge.s32.totalorder %s36, 2
      %s38 = scalar_select %p37, 0, %s36
      %s39 = ssub.s32 %s26, %s38
      %p40 = scmp.eq.s32.totalorder %s39, 0
      %s42 = sadd.s32 %s41, 1
      %s43 = scalar_select %p40, %s41, %s42
      %p46 = pneg %p40
      %p47 = scmp.eq.s32.totalorder %s19, 1
      %p48 = por %p46, %p47
      %p49 = scmp.ne.s32.totalorder %s41, %s44
      %p50 = scmp.eq.s32.totalorder %s19, 0
      %p51 = por %p49, %p50
      %p52 = scmp.ne.s32.totalorder %s41, %s44
      %p53 = scmp.eq.s32.totalorder %s24, 1
      %p54 = por %p52, %p53
      %p55 = scmp.ne.s32.totalorder %s44, %s45
      %p56 = scmp.eq.s32.totalorder %s24, 0
      %p57 = por %p55, %p56
      %p58 = scmp.ne.s32.totalorder %s44, %s45
      %p59 = scmp.eq.s32.totalorder %s25, 1
      %p60 = por %p58, %p59
      %p62 = scmp.ne.s32.totalorder %s45, %s61
      %p63 = scmp.eq.s32.totalorder %s25, 0
      %p64 = por %p62, %p63
      %s65 = ssub.s32 %s27, %s34
      %p66 = scmp.eq.s32.totalorder %s65, 0
      %s68 = sadd.s32 %s67, 1
      %s69 = scalar_select %p66, %s67, %s68
      %p72 = pneg %p66
      %p73 = scmp.eq.s32.totalorder %s19, 1
      %p74 = por %p72, %p73
      %p75 = scmp.ne.s32.totalorder %s67, %s70
      %p76 = scmp.eq.s32.totalorder %s19, 0
      %p77 = por %p75, %p76
      %p78 = scmp.ne.s32.totalorder %s67, %s70
      %p79 = scmp.eq.s32.totalorder %s24, 1
      %p80 = por %p78, %p79
      %p81 = scmp.ne.s32.totalorder %s70, %s71
      %p82 = scmp.eq.s32.totalorder %s24, 0
      %p83 = por %p81, %p82
      %p84 = scmp.ne.s32.totalorder %s70, %s71
      %p85 = scmp.eq.s32.totalorder %s25, 1
      %p86 = por %p84, %p85
      %p88 = scmp.ne.s32.totalorder %s71, %s87
      %p89 = scmp.eq.s32.totalorder %s25, 0
      %p90 = por %p88, %p89
      %s91 = ssub.s32 %s27, %s34
      %p92 = scmp.eq.s32.totalorder %s91, 0
      %s94 = sadd.s32 %s93, 1
      %s95 = scalar_select %p92, %s93, %s94
      %p98 = pneg %p92
      %p99 = scmp.eq.s32.totalorder %s19, 1
      %p100 = por %p98, %p99
      %p101 = scmp.ne.s32.totalorder %s93, %s96
      %p102 = scmp.eq.s32.totalorder %s19, 0
      %p103 = por %p101, %p102
      %p104 = scmp.ne.s32.totalorder %s93, %s96
      %p105 = scmp.eq.s32.totalorder %s24, 1
      %p106 = por %p104, %p105
      %p107 = scmp.ne.s32.totalorder %s96, %s97
      %p108 = scmp.eq.s32.totalorder %s24, 0
      %p109 = por %p107, %p108
      %p110 = scmp.ne.s32.totalorder %s96, %s97
      %p111 = scmp.eq.s32.totalorder %s25, 1
      %p112 = por %p110, %p111
      %p114 = scmp.ne.s32.totalorder %s97, %s113
      %p115 = scmp.eq.s32.totalorder %s25, 0
      %p116 = por %p114, %p115
      %s117 = ssub.s32 %s27, %s34
      %p118 = scmp.eq.s32.totalorder %s117, 0
      %s120 = sadd.s32 %s119, 1
      %s121 = scalar_select %p118, %s119, %s120
      %p124 = pneg %p118
      %p125 = scmp.eq.s32.totalorder %s19, 1
      %p126 = por %p124, %p125
      %p127 = scmp.ne.s32.totalorder %s119, %s122
      %p128 = scmp.eq.s32.totalorder %s19, 0
      %p129 = por %p127, %p128
      %p130 = scmp.ne.s32.totalorder %s119, %s122
      %p131 = scmp.eq.s32.totalorder %s24, 1
      %p132 = por %p130, %p131
      %p133 = scmp.ne.s32.totalorder %s122, %s123
      %p134 = scmp.eq.s32.totalorder %s24, 0
      %p135 = por %p133, %p134
      %p136 = scmp.ne.s32.totalorder %s122, %s123
      %p137 = scmp.eq.s32.totalorder %s25, 1
      %p138 = por %p136, %p137
      %p140 = scmp.ne.s32.totalorder %s123, %s139
      %p141 = scmp.eq.s32.totalorder %s25, 0
      %p142 = por %p140, %p141
      %s144 = sadd.s32 %s143, 1
      %p147 = scmp.eq.s32.totalorder %s19, 1
      %p148 = scmp.ne.s32.totalorder %s143, %s145
      %p149 = scmp.eq.s32.totalorder %s19, 0
      %p150 = por %p148, %p149
      %p151 = scmp.ne.s32.totalorder %s143, %s145
      %p152 = scmp.eq.s32.totalorder %s24, 1
      %p153 = por %p151, %p152
      %p154 = scmp.ne.s32.totalorder %s145, %s146
      %p155 = scmp.eq.s32.totalorder %s24, 0
      %p156 = por %p154, %p155
      %p157 = scmp.ne.s32.totalorder %s145, %s146
      %p158 = scmp.eq.s32.totalorder %s25, 1
      %p159 = por %p157, %p158
      %p161 = scmp.ne.s32.totalorder %s146, %s160
      %p162 = scmp.eq.s32.totalorder %s25, 0
      %p163 = por %p161, %p162
      %s164 = ssub.s32 %s26, %s38
      %p165 = scmp.eq.s32.totalorder %s164, 0
      %s167 = sadd.s32 %s166, 1
      %s168 = scalar_select %p165, %s166, %s167
      %p171 = pneg %p165
      %p172 = scmp.eq.s32.totalorder %s19, 1
      %p173 = por %p171, %p172
      %p174 = scmp.ne.s32.totalorder %s166, %s169
      %p175 = scmp.eq.s32.totalorder %s19, 0
      %p176 = por %p174, %p175
      %p177 = scmp.ne.s32.totalorder %s166, %s169
      %p178 = scmp.eq.s32.totalorder %s24, 1
      %p179 = por %p177, %p178
      %p180 = scmp.ne.s32.totalorder %s169, %s170
      %p181 = scmp.eq.s32.totalorder %s24, 0
      %p182 = por %p180, %p181
      %p183 = scmp.ne.s32.totalorder %s169, %s170
      %p184 = scmp.eq.s32.totalorder %s25, 1
      %p185 = por %p183, %p184
      %p187 = scmp.ne.s32.totalorder %s170, %s186
      %p188 = scmp.eq.s32.totalorder %s25, 0
      %p189 = por %p187, %p188
      %p190 = scmp.le.s32.totalorder 1, %s19
      %p191 = scmp.lt.s32.totalorder %s19, 3
      %p192 = pnand %p190, %p191
      %p193 = pneg %p192
      // Predicated region
      $region9: #{tpu_custom_call.1} parent=5 // pred_check
        _
      $region10: #{tpu_custom_call.1} parent=5 // pred_check_branch
        %195 = sbr.rel (%p192) target = $region12
      $region11: #{tpu_custom_call.1} parent=5 // pred_region
        %s196 = ssub.s32 %s19, 1
        // Predicated region
        $region13: #{tpu_custom_call.1} parent=11 // pred_check
          %p197 = pneg %p83
        $region14: #{tpu_custom_call.1} parent=11 // pred_check_branch
          %199 = sbr.rel (%p197) target = $region16
        $region15: #{tpu_custom_call.1} parent=11 // pred_region
          %201 = vsyncadd [#allocation7], 0
          %s202 = smul.addr %s29, 4
          %s203 = scalar_lea.hbm %s1, %s202
          %s204 = sshll.u32 %s203, 4
          %s205 = int_to_ptr.hbm [resolvable:$true] %s204
          %s206 = sshll.u32 [#allocation6], 4
          %s207 = int_to_ptr.vmem [resolvable:$true] %s206
          %212 = dma.hbm_to_vmem [thread:$0]  %s205, 1024, %s207, [#allocation7], 64, 64, 4
        $region16: #{tpu_custom_call.1} parent=11 // pred_fallthru
          _
        // Predicated region
        $region17: #{tpu_custom_call.1} parent=11 // pred_check
          %p213 = pneg %p109
        $region18: #{tpu_custom_call.1} parent=11 // pred_check_branch
          %215 = sbr.rel (%p213) target = $region20
        $region19: #{tpu_custom_call.1} parent=11 // pred_region
          %p216 = scmp.lt.s32.totalorder %s29, 0
          %s217 = scalar_select %p216, %s29, 0
          %s218 = scalar_lea.vmem %s2, %s217
        $region20: #{tpu_custom_call.1} parent=11 // pred_fallthru
          _
        // Predicated region
        $region21: #{tpu_custom_call.1} parent=11 // pred_check
          %p219 = pneg %p135
        $region22: #{tpu_custom_call.1} parent=11 // pred_check_branch
          %221 = sbr.rel (%p219) target = $region24
        $region23: #{tpu_custom_call.1} parent=11 // pred_region
          %s222 = smul.u32 16, %s29
          %224 = vsyncadd [#allocation7], 0
          %s225 = smul.addr %s222, 4
          %s226 = scalar_lea.hbm %s3, %s225
          %s227 = sshll.u32 %s226, 4
          %s228 = int_to_ptr.hbm [resolvable:$true] %s227
          %s229 = sshll.u32 [#allocation8], 4
          %s230 = int_to_ptr.vmem [resolvable:$true] %s229
          %235 = dma.hbm_to_vmem [thread:$0]  %s228, 1024, %s230, [#allocation7], 64, 64, 4
        $region24: #{tpu_custom_call.1} parent=11 // pred_fallthru
          _
        // Predicated region
        $region25: #{tpu_custom_call.1} parent=11 // pred_check
          %p236 = pneg %p156
        $region26: #{tpu_custom_call.1} parent=11 // pred_check_branch
          %238 = sbr.rel (%p236) target = $region28
        $region27: #{tpu_custom_call.1} parent=11 // pred_region
          %240 = vsyncadd [#allocation10], 0
          %s242 = sshll.u32 %s4, 4
          %s243 = int_to_ptr.hbm [resolvable:$true] %s242
          %s244 = sshll.u32 [#allocation9], 4
          %s245 = int_to_ptr.vmem [resolvable:$true] %s244
          %247 = dma.hbm_to_vmem [thread:$0]  %s243, 64, %s245, [#allocation10]
        $region28: #{tpu_custom_call.1} parent=11 // pred_fallthru
          _
      $region12: #{tpu_custom_call.1} parent=5 // pred_fallthru
        _
      %p248 = scmp.lt.s32.totalorder %s19, 2
      // Predicated region
      $region29: #{tpu_custom_call.1} parent=5 // pred_check
        %p249 = pneg %p248
      $region30: #{tpu_custom_call.1} parent=5 // pred_check_branch
        %251 = sbr.rel (%p249) target = $region32
      $region31: #{tpu_custom_call.1} parent=5 // pred_region
        // Predicated region
        $region33: #{tpu_custom_call.1} parent=31 // pred_check
          %p252 = pneg %p51
        $region34: #{tpu_custom_call.1} parent=31 // pred_check_branch
          %254 = sbr.rel (%p252) target = $region36
        $region35: #{tpu_custom_call.1} parent=31 // pred_region
          %s255 = sand.u32 %s41, 1
          %s256 = scalar_lea.sflag [#allocation4], %s255
          %s257 = sand.u32 %s41, 1
          %s258 = smul.addr %s257, 8
          %s259 = scalar_lea.vmem [#allocation3], %s258
          %261 = vsyncadd %s256, 0
          %s262 = smul.addr %s26, 8
          %s263 = scalar_lea.hbm %s0, %s262
          %s265 = sshll.u32 %s263, 4
          %s266 = int_to_ptr.hbm [resolvable:$true] %s265
          %s267 = sshll.u32 %s259, 4
          %s268 = int_to_ptr.vmem [resolvable:$true] %s267
          %270 = dma.hbm_to_vmem [thread:$0]  %s266, 128, %s268, %s256
        $region36: #{tpu_custom_call.1} parent=31 // pred_fallthru
          _
      $region32: #{tpu_custom_call.1} parent=5 // pred_fallthru
        _
      %p271 = scmp.le.s32.totalorder 1, %s19
      %p272 = scmp.lt.s32.totalorder %s19, 3
      %p273 = pnand %p271, %p272
      %p274 = pneg %p273
      // Predicated region
      $region37: #{tpu_custom_call.1} parent=5 // pred_check
        _
      $region38: #{tpu_custom_call.1} parent=5 // pred_check_branch
        %276 = sbr.rel (%p273) target = $region40
      $region39: #{tpu_custom_call.1} parent=5 // pred_region
        %s277 = ssub.s32 %s19, 1
        %s278 = sand.u32 %s44, 1
        %s279 = scalar_lea.sflag [#allocation4], %s278
        %s280 = sand.u32 %s44, 1
        %s281 = smul.addr %s280, 8
        %s282 = scalar_lea.vmem [#allocation3], %s281
        // Predicated region
        $region41: #{tpu_custom_call.1} parent=39 // pred_check
          %p283 = pneg %p57
        $region42: #{tpu_custom_call.1} parent=39 // pred_check_branch
          %285 = sbr.rel (%p283) target = $region44
        $region43: #{tpu_custom_call.1} parent=39 // pred_region
          %287 = dma.done %s279, 128
        $region44: #{tpu_custom_call.1} parent=39 // pred_fallthru
          _
        // Predicated region
        $region45: #{tpu_custom_call.1} parent=39 // pred_check
          %p288 = pneg %p83
        $region46: #{tpu_custom_call.1} parent=39 // pred_check_branch
          %290 = sbr.rel (%p288) target = $region48
        $region47: #{tpu_custom_call.1} parent=39 // pred_region
          %292 = dma.done [#allocation7], 1024
        $region48: #{tpu_custom_call.1} parent=39 // pred_fallthru
          _
        // Predicated region
        $region49: #{tpu_custom_call.1} parent=39 // pred_check
          %p293 = pneg %p135
        $region50: #{tpu_custom_call.1} parent=39 // pred_check_branch
          %295 = sbr.rel (%p293) target = $region52
        $region51: #{tpu_custom_call.1} parent=39 // pred_region
          %297 = dma.done [#allocation7], 1024
        $region52: #{tpu_custom_call.1} parent=39 // pred_fallthru
          _
        // Predicated region
        $region53: #{tpu_custom_call.1} parent=39 // pred_check
          %p298 = pneg %p156
        $region54: #{tpu_custom_call.1} parent=39 // pred_check_branch
          %300 = sbr.rel (%p298) target = $region56
        $region55: #{tpu_custom_call.1} parent=39 // pred_region
          %302 = dma.done [#allocation10], 64
        $region56: #{tpu_custom_call.1} parent=39 // pred_fallthru
          _
        %s303 = sand.u32 %s44, 1
        %s304 = scalar_lea.sflag [#allocation4], %s303
        %s305 = sand.u32 %s44, 1
        %s306 = smul.addr %s305, 8
        %s307 = scalar_lea.vmem [#allocation3], %s306
        %p308 = pneg %p57
        %p309 = pneg %p54
        %p310 = pneg %p83
        %p311 = pneg %p80
        %p312 = scmp.lt.s32.totalorder %s29, 0
        %s313 = scalar_select %p312, %s29, 0
        %s314 = scalar_lea.vmem %s2, %s313
        %p315 = pneg %p109
        %p316 = pneg %p106
        %p317 = pneg %p135
        %p318 = pneg %p132
        %p319 = pneg %p156
        %p320 = pneg %p153
        %p321 = pneg %p182
        %p322 = pneg %p179
        %s323 = sand.u32 %s169, 1
        %s324 = scalar_lea.sflag [#allocation5], %s323
        %s325 = sand.u32 %s169, 1
        %s326 = smul.addr %s325, 8
        %s327 = scalar_lea.vmem [#allocation11], %s326
        %p328 = scmp.lt.s32.totalorder %s29, 0
        %s329 = scalar_select %p328, %s29, 0
        %s330 = scalar_lea.vmem %s2, %s329
        %s331 = smul.u32 16, %s29
        %p332 = scmp.eq.s32.totalorder %s29, 0
        // Predicated region
        $region57: #{tpu_custom_call.1} parent=39 // pred_check
          %p333 = pneg %p332
        $region58: #{tpu_custom_call.1} parent=39 // pred_check_branch
          %335 = sbr.rel (%p333) target = $region60
        $region59: #{tpu_custom_call.1} parent=39 // pred_region
          %336 = vst [vmem:[#allocation2] sm:$0xff] 0.0
        $region60: #{tpu_custom_call.1} parent=39 // pred_fallthru
          _
        %v337 = vld [vmem:[%s282] sm:$0xff]
        %v338 = vpack.c.bf16 %v337, %v337
        %v339 = vld [vmem:[#allocation6] sm:$0xf]
        %v340 = vld [vmem:[#allocation6 + $0x4] sm:$0xf]
        %v341 = vld [vmem:[#allocation6 + $0x8] sm:$0xf]
        %v342 = vld [vmem:[#allocation6 + $0xc] sm:$0xf]
        %v343 = vld [vmem:[#allocation6 + $0x10] sm:$0xf]
        %v344 = vld [vmem:[#allocation6 + $0x14] sm:$0xf]
        %v345 = vld [vmem:[#allocation6 + $0x18] sm:$0xf]
        %v346 = vld [vmem:[#allocation6 + $0x1c] sm:$0xf]
        %v347 = vld [vmem:[#allocation6 + $0x20] sm:$0xf]
        %v348 = vld [vmem:[#allocation6 + $0x24] sm:$0xf]
        %v349 = vld [vmem:[#allocation6 + $0x28] sm:$0xf]
        %v350 = vld [vmem:[#allocation6 + $0x2c] sm:$0xf]
        %v351 = vld [vmem:[#allocation6 + $0x30] sm:$0xf]
        %v352 = vld [vmem:[#allocation6 + $0x34] sm:$0xf]
        %v353 = vld [vmem:[#allocation6 + $0x38] sm:$0xf]
        %v354 = vld [vmem:[#allocation6 + $0x3c] sm:$0xf]
        %v355 = vld [vmem:[%s330] sm:$0x1]
        %v357 = vperm.slane %v355, 0
        %v375 = vunpack.c.l.b16 %v339
        %v376 = vunpack.c.l.b16 %v340
        %v377 = vunpack.c.l.b16 %v341
        %v378 = vunpack.c.l.b16 %v342
        %v379 = vunpack.c.l.b16 %v343
        %v380 = vunpack.c.l.b16 %v344
        %v381 = vunpack.c.l.b16 %v345
        %v382 = vunpack.c.l.b16 %v346
        %v383 = vunpack.c.l.b16 %v347
        %v384 = vunpack.c.l.b16 %v348
        %v385 = vunpack.c.l.b16 %v349
        %v386 = vunpack.c.l.b16 %v350
        %v387 = vunpack.c.l.b16 %v351
        %v388 = vunpack.c.l.b16 %v352
        %v389 = vunpack.c.l.b16 %v353
        %v390 = vunpack.c.l.b16 %v354
        %v391 = vpack.c.b16 %v376, %v375
        %v392 = vpack.c.b16 %v378, %v377
        %v393 = vpack.c.b16 %v380, %v379
        %v394 = vpack.c.b16 %v382, %v381
        %v395 = vpack.c.b16 %v384, %v383
        %v396 = vpack.c.b16 %v386, %v385
        %v397 = vpack.c.b16 %v388, %v387
        %v398 = vpack.c.b16 %v390, %v389
        %407 = vmatpush.bf16.msra.mxu0 %v398
        %408 = vmatpush.bf16.msra.mxu0 %v397
        %409 = vmatpush.bf16.msra.mxu0 %v396
        %410 = vmatpush.bf16.msra.mxu0 %v395
        %411 = vmatpush.bf16.msra.mxu0 %v394
        %412 = vmatpush.bf16.msra.mxu0 %v393
        %413 = vmatpush.bf16.msra.mxu0 %v392
        %414 = vmatpush.bf16.msra.mxu0 %v391
        %415 = vmatmul.bf16.gmra.mxu0 %v338
        %v416 = vpop.f32.mrf.mxu0
        %v417 = vadd.f32 %v357, %v416
        %v418 = vpop.f32.mrf.mxu0
        %419 = vdwg.mxu0
        %v420 = vmax.f32 %v417, 0.0
        %v421 = vld [vmem:[#allocation2] sm:$0xff]
        %v422 = vpack.c.bf16 %v420, %v420
        %v423 = vld [vmem:[#allocation8] sm:$0xf]
        %v424 = vld [vmem:[#allocation8 + $0x4] sm:$0xf]
        %v425 = vld [vmem:[#allocation8 + $0x8] sm:$0xf]
        %v426 = vld [vmem:[#allocation8 + $0xc] sm:$0xf]
        %v427 = vld [vmem:[#allocation8 + $0x10] sm:$0xf]
        %v428 = vld [vmem:[#allocation8 + $0x14] sm:$0xf]
        %v429 = vld [vmem:[#allocation8 + $0x18] sm:$0xf]
        %v430 = vld [vmem:[#allocation8 + $0x1c] sm:$0xf]
        %v431 = vld [vmem:[#allocation8 + $0x20] sm:$0xf]
        %v432 = vld [vmem:[#allocation8 + $0x24] sm:$0xf]
        %v433 = vld [vmem:[#allocation8 + $0x28] sm:$0xf]
        %v434 = vld [vmem:[#allocation8 + $0x2c] sm:$0xf]
        %v435 = vld [vmem:[#allocation8 + $0x30] sm:$0xf]
        %v436 = vld [vmem:[#allocation8 + $0x34] sm:$0xf]
        %v437 = vld [vmem:[#allocation8 + $0x38] sm:$0xf]
        %v438 = vld [vmem:[#allocation8 + $0x3c] sm:$0xf]
        %v455 = vunpack.c.l.b16 %v423
        %v456 = vunpack.c.l.b16 %v424
        %v457 = vunpack.c.l.b16 %v425
        %v458 = vunpack.c.l.b16 %v426
        %v459 = vunpack.c.l.b16 %v427
        %v460 = vunpack.c.l.b16 %v428
        %v461 = vunpack.c.l.b16 %v429
        %v462 = vunpack.c.l.b16 %v430
        %v463 = vunpack.c.l.b16 %v431
        %v464 = vunpack.c.l.b16 %v432
        %v465 = vunpack.c.l.b16 %v433
        %v466 = vunpack.c.l.b16 %v434
        %v467 = vunpack.c.l.b16 %v435
        %v468 = vunpack.c.l.b16 %v436
        %v469 = vunpack.c.l.b16 %v437
        %v470 = vunpack.c.l.b16 %v438
        %v471 = vpack.c.b16 %v456, %v455
        %v472 = vpack.c.b16 %v458, %v457
        %v473 = vpack.c.b16 %v460, %v459
        %v474 = vpack.c.b16 %v462, %v461
        %v475 = vpack.c.b16 %v464, %v463
        %v476 = vpack.c.b16 %v466, %v465
        %v477 = vpack.c.b16 %v468, %v467
        %v478 = vpack.c.b16 %v470, %v469
        %487 = vmatpush.bf16.msra.mxu0 %v478
        %488 = vmatpush.bf16.msra.mxu0 %v477
        %489 = vmatpush.bf16.msra.mxu0 %v476
        %490 = vmatpush.bf16.msra.mxu0 %v475
        %491 = vmatpush.bf16.msra.mxu0 %v474
        %492 = vmatpush.bf16.msra.mxu0 %v473
        %493 = vmatpush.bf16.msra.mxu0 %v472
        %494 = vmatpush.bf16.msra.mxu0 %v471
        %495 = vmatmul.bf16.gmra.mxu0 %v422
        %v496 = vpop.f32.mrf.mxu0
        %v497 = vadd.f32 0.0, %v496
        %v498 = vpop.f32.mrf.mxu0
        %499 = vdwg.mxu0
        %v500 = vadd.f32 %v421, %v497
        %501 = vst [vmem:[#allocation2] sm:$0xff] %v500
        // Predicated region
        $region61: #{tpu_custom_call.1} parent=39 // pred_check
          %p502 = pneg %p332
        $region62: #{tpu_custom_call.1} parent=39 // pred_check_branch
          %504 = sbr.rel (%p502) target = $region64
        $region63: #{tpu_custom_call.1} parent=39 // pred_region
          %v505 = vld [vmem:[#allocation9] sm:$0x7]
          %v506 = vld [vmem:[#allocation2] sm:$0xff]
          %v507 = vperm.slane %v505, 0
          %v508 = vadd.f32 %v506, %v507
          %v509 = vadd.f32 %v508, %v337
          %510 = vadd.xlane.f32.xlu0 %v509
          %v511 = vpop.xlane.xlu0 %510
          %v512 = vmul.f32 %v511, 0.03125
          %v513 = vsub.f32 %v509, %v512
          %v514 = vmul.f32 %v513, %v513
          %515 = vadd.xlane.f32.xlu0 %v514
          %v516 = vpop.xlane.xlu0 %515
          %v517 = vmul.f32 %v512, %v512
          %v518 = vmul.f32 %v517, 96.0
          %v519 = vsub.f32 %v516, %v518
          %v520 = vmul.f32 %v519, 0.03125
          %v521 = vadd.f32 %v520, 1e-06
          %v522 = vrsqrt.pop %v521
          %v523 = vmul.f32 %v522, %v521
          %v524 = vmul.f32 %v523, %v522
          %v525 = vmul.f32 0.5, %v524
          %v526 = vsub.f32 1.5, %v525
          %v527 = vmul.f32 %v522, %v526
          %vm528 = vweird.f32 %v521
          %vm529 = vweird.f32 %v522
          %vm530 = vmor %vm528, %vm529
          %v531 = vsel %vm530, %v522, %v527
          %v532 = vmul.f32 %v513, %v531
          %v533 = vperm.slane %v505, 1
          %v534 = vmul.f32 %v532, %v533
          %v535 = vperm.slane %v505, 2
          %v536 = vadd.f32 %v534, %v535
          %537 = vst [vmem:[%s327] sm:$0xff] %v536
        $region64: #{tpu_custom_call.1} parent=39 // pred_fallthru
          _
        %s538 = sand.u32 %s169, 1
        %s539 = scalar_lea.sflag [#allocation5], %s538
        %s540 = sand.u32 %s169, 1
        %s541 = smul.addr %s540, 8
        %s542 = scalar_lea.vmem [#allocation11], %s541
        // Predicated region
        $region65: #{tpu_custom_call.1} parent=39 // pred_check
          %p543 = pneg %p179
        $region66: #{tpu_custom_call.1} parent=39 // pred_check_branch
          %545 = sbr.rel (%p543) target = $region68
        $region67: #{tpu_custom_call.1} parent=39 // pred_region
          %547 = vsyncadd %s539, 0
          %s548 = smul.addr %s28, 8
          %s549 = scalar_lea.hbm %s5, %s548
          %s551 = sshll.u32 %s542, 4
          %s552 = int_to_ptr.vmem [resolvable:$true] %s551
          %s553 = sshll.u32 %s549, 4
          %s554 = int_to_ptr.hbm [resolvable:$true] %s553
          %556 = dma.vmem_to_hbm [thread:$0]  %s552, 128, %s554, %s539
        $region68: #{tpu_custom_call.1} parent=39 // pred_fallthru
          _
      $region40: #{tpu_custom_call.1} parent=5 // pred_fallthru
        _
      %p557 = scmp.le.s32.totalorder 2, %s19
      // Predicated region
      $region69: #{tpu_custom_call.1} parent=5 // pred_check
        %p558 = pneg %p557
      $region70: #{tpu_custom_call.1} parent=5 // pred_check_branch
        %560 = sbr.rel (%p558) target = $region72
      $region71: #{tpu_custom_call.1} parent=5 // pred_region
        %s561 = ssub.s32 %s19, 2
        // Predicated region
        $region73: #{tpu_custom_call.1} parent=71 // pred_check
          %p562 = pneg %p185
        $region74: #{tpu_custom_call.1} parent=71 // pred_check_branch
          %564 = sbr.rel (%p562) target = $region76
        $region75: #{tpu_custom_call.1} parent=71 // pred_region
          %s565 = sand.u32 %s170, 1
          %s566 = scalar_lea.sflag [#allocation5], %s565
          %s567 = sand.u32 %s170, 1
          %s568 = smul.addr %s567, 8
          %s569 = scalar_lea.vmem [#allocation11], %s568
          %571 = dma.done %s566, 128
        $region76: #{tpu_custom_call.1} parent=71 // pred_fallthru
          _
      $region72: #{tpu_custom_call.1} parent=5 // pred_fallthru
        _
    $region6: #{tpu_custom_call.1} parent=1 // loop_footer
      %s23 = sadd.s32 1, %s19
    $region7: #{tpu_custom_call.1} parent=1 // loop_footer_branch
      %18 = sbr.rel target = $region3
    $region8: #{tpu_custom_call.1} parent=1 // loop_exit
      _
    %572 = vsyncpa [#allocation4], 1
    %s573 = scalar_lea.sflag [#allocation4], 1
    %574 = vsyncpa %s573, 1
    %575 = vsyncpa [#allocation7], 1
    %576 = vsyncpa [#allocation10], 1
    %577 = vsyncpa [#allocation5], 1
    %s578 = scalar_lea.sflag [#allocation5], 1
    %579 = vsyncpa %s578, 1

</llo_original>
